<compile_context>
chip_gen: v7x
topology: tpu7x:2x2x1
jax: 0.10.0
libtpu: 0.0.40
codegen_flags: <defaults>
</compile_context>

<pallas_src>
import functools

import jax
import jax.numpy as jnp
from jax.experimental import pallas as pl
from jax.experimental.pallas import tpu as pltpu


def senet_kernel(x_ref, w1t_ref, b1_ref, w2t_ref, b2_ref, o_ref, *, inv_hw):
    # x_ref block: (Bt, C, HW).  Every op below is per-batch-row independent,
    # so a partial last batch block (grid = cdiv(B, Bt)) is safe: rows beyond
    # B may hold garbage, but they cannot contaminate valid rows and Pallas
    # masks their writeback.
    x = x_ref[...]                                                     # (Bt, C, HW)

    # squeeze: global average pool; the f32 widen is fused into the reduction
    # (no full-width f32 copy of the block).
    pooled = jnp.sum(x, axis=-1, dtype=jnp.float32) * inv_hw           # (Bt, C)

    # excite: fc1 -> relu   (lane-dense (Bt, Cr) result)
    h = jnp.dot(pooled, w1t_ref[...],
                preferred_element_type=jnp.float32,
                precision=jax.lax.Precision.HIGHEST) + b1_ref[...]     # (Bt, Cr)
    h = jnp.maximum(h, 0.0)

    # fc2 -> sigmoid        (lane-dense (Bt, C) result)
    s = jnp.dot(h, w2t_ref[...],
                preferred_element_type=jnp.float32,
                precision=jax.lax.Precision.HIGHEST) + b2_ref[...]     # (Bt, C)
    s = jax.nn.sigmoid(s)

    # scale: per-(batch, channel) gate broadcast over the spatial lanes
    o_ref[...] = (x * s[:, :, None].astype(x.dtype)).astype(o_ref.dtype)


def _vmem_capacity_bytes():
    """Physical VMEM per TensorCore; conservative fallback if unqueryable."""
    try:
        return int(pltpu.get_tpu_info().vmem_capacity_bytes)
    except Exception:
        return 64 << 20   # v7x per-TC size: the smallest across v5e/v6e/v7x


def senet_block(x, w1, b1, w2, b2, *, target_block_bytes=None):
    """x: (B, C, H, W) (NCHW, same as PyTorch).  Returns (B, C, H, W).

    w1: (C//r, C) fc1.weight, b1: (C//r,) fc1.bias
    w2: (C, C//r) fc2.weight, b2: (C,)   fc2.bias
    """
    B, C, H, W = x.shape
    HW = H * W
    Cr = w1.shape[0]
    itemsize = jnp.dtype(x.dtype).itemsize

    # ---- generation-aware budgets --------------------------------------------
    vmem_cap = _vmem_capacity_bytes()
    if target_block_bytes is None:
        # ~8 MiB blocks on 128 MiB-VMEM chips (v5e/v6e), ~4 MiB on v7x (64 MiB);
        # tiled-stream measurements show >= ~86% of HBM roofline at these sizes.
        target_block_bytes = (8 << 20) if vmem_cap >= (100 << 20) else (4 << 20)
    # Scoped-VMEM ceiling: generous on 128 MiB chips, tight on v7x so the
    # compiler keeps headroom for its internal scratch.
    vmem_ceiling = min(80 << 20, (vmem_cap * 9) // 16)

    # ---- flatten spatial axis (free, metadata-only reshape; NO HBM pad) ------
    x2 = x.reshape(B, C, HW)

    # ---- batch tile -----------------------------------------------------------
    per_batch_bytes = C * HW * itemsize
    Bt = max(1, min(B, target_block_bytes // per_batch_bytes))
    # Round Bt up to a full sublane group (8 f32 / 16 bf16) so the pooled and
    # gate intermediates and both matmuls are sublane-dense (free win).
    sub = 8 * max(1, 4 // itemsize)
    Bt = min(B, -(-Bt // sub) * sub)
    # Keep >= 4 grid steps when B allows (2 per TensorCore on v7x megacore,
    # >= double-buffer pipeline depth on single-TC v5e/v6e).
    steps_floor = 4
    if B >= steps_floor:
        Bt = max(1, min(Bt, -(-B // steps_floor)))
    grid = (pl.cdiv(B, Bt),)   # partial last block handled by Pallas masking

    # ---- weights: pre-transpose so the in-kernel matmuls are lane-dense ------
    w1t = jnp.asarray(w1).T                  # (C, Cr)
    w2t = jnp.asarray(w2).T                  # (Cr, C)
    b1r = jnp.asarray(b1).reshape(1, Cr)
    b2r = jnp.asarray(b2).reshape(1, C)

    # ---- explicit VMEM budget: double-buffered in + out blocks + weights -----
    block_bytes = Bt * per_batch_bytes
    weight_bytes = sum(int(a.size) * jnp.dtype(a.dtype).itemsize
                       for a in (w1t, w2t, b1r, b2r))
    needed = 4 * block_bytes + 2 * weight_bytes + (2 << 20)
    vmem_limit = int(max(16 << 20, min(vmem_ceiling, needed)))
    # TODO(synk): if even Bt=1 overshoots the v7x budget (very large C*HW),
    # fall back to a two-pass variant (pool+excite kernel emitting the (B, C)
    # gate, then a spatially-tiled scale kernel); not needed at these shapes.

    kern = functools.partial(senet_kernel, inv_hw=1.0 / HW)

    out = pl.pallas_call(
        kern,
        out_shape=jax.ShapeDtypeStruct((B, C, HW), x.dtype),
        grid_spec=pltpu.PrefetchScalarGridSpec(
            num_scalar_prefetch=0,
            grid=grid,
            in_specs=[
                pl.BlockSpec((Bt, C, HW), lambda i: (i, 0, 0)),    # x (batch tile)
                pl.BlockSpec((C, Cr), lambda i: (0, 0)),           # fc1.weight^T
                pl.BlockSpec((1, Cr), lambda i: (0, 0)),           # fc1.bias
                pl.BlockSpec((Cr, C), lambda i: (0, 0)),           # fc2.weight^T
                pl.BlockSpec((1, C), lambda i: (0, 0)),            # fc2.bias
            ],
            out_specs=pl.BlockSpec((Bt, C, HW), lambda i: (i, 0, 0)),
        ),
        compiler_params=pltpu.CompilerParams(
            # Batch tiles are independent work: lets v7x megacore shard the
            # grid across both TensorCores; harmless no-op on v5e/v6e.
            dimension_semantics=("parallel",),
            vmem_limit_bytes=vmem_limit,
        ),
    )(x2, w1t, b1r, w2t, b2r)

    return out.reshape(B, C, H, W)


def reference(x, w1, b1, w2, b2):
    """Plain-JAX reference matching PyTorch SENetBlock.forward."""
    hi = jax.lax.Precision.HIGHEST
    y = jnp.mean(x.astype(jnp.float32), axis=(2, 3))                       # (B, C)
    y = jax.nn.relu(jnp.dot(y, w1.T, precision=hi) + b1)                   # (B, C//r)
    y = jax.nn.sigmoid(jnp.dot(y, w2.T, precision=hi) + b2)                # (B, C)
    return x * y[:, :, None, None].astype(x.dtype)


if __name__ == "__main__":
    # Small, module-consistent shapes: channels must be >= reduction.
    B, C, H, W = 2, 32, 16, 16
    reduction = 16
    Cr = C // reduction

    key = jax.random.PRNGKey(0)
    kx, k1, k2, k3, k4 = jax.random.split(key, 5)

    x = jax.random.normal(kx, (B, C, H, W), dtype=jnp.float32)

    # Deterministic PyTorch-style Linear init: U(-1/sqrt(fan_in), 1/sqrt(fan_in))
    bound1 = 1.0 / (C ** 0.5)
    w1 = jax.random.uniform(k1, (Cr, C), jnp.float32, -bound1, bound1)   # fc1.weight
    b1 = jax.random.uniform(k2, (Cr,), jnp.float32, -bound1, bound1)     # fc1.bias
    bound2 = 1.0 / (Cr ** 0.5)
    w2 = jax.random.uniform(k3, (C, Cr), jnp.float32, -bound2, bound2)   # fc2.weight
    b2 = jax.random.uniform(k4, (C,), jnp.float32, -bound2, bound2)      # fc2.bias

    out = senet_block(x, w1, b1, w2, b2)
    out = jax.block_until_ready(out)

    ref = reference(x, w1, b1, w2, b2)
    assert out.shape == (B, C, H, W)
    assert jnp.allclose(out, ref, atol=1e-4, rtol=1e-4), "mismatch vs reference"

    print("KERNEL_OK")
</pallas_src>

<mosaic_0001>
module attributes {stable_mosaic.version = 11 : i64} {
  func.func @senet_kernel(%arg0: i32, %arg1: memref<2x32x256xf32, #tpu.memory_space<vmem>>, %arg2: memref<32x2xf32, #tpu.memory_space<vmem>>, %arg3: memref<1x2xf32, #tpu.memory_space<vmem>>, %arg4: memref<2x32xf32, #tpu.memory_space<vmem>>, %arg5: memref<1x32xf32, #tpu.memory_space<vmem>>, %arg6: memref<2x32x256xf32, #tpu.memory_space<vmem>>) attributes {dimension_semantics = [#tpu.dimension_semantics<parallel>], iteration_bounds = array<i64: 1>, scalar_prefetch = 0 : i64, scratch_operands = 0 : i64, tpu.core_type = #tpu.core_type<tc>, window_params = [{transform_indices = @transform_0, window_bounds = array<i64: 2, 32, 256>}, {pipeline_mode = #tpu.pipeline_mode<synchronous>, transform_indices = @transform_1, window_bounds = array<i64: 32, 2>}, {pipeline_mode = #tpu.pipeline_mode<synchronous>, transform_indices = @transform_2, window_bounds = array<i64: 1, 2>}, {pipeline_mode = #tpu.pipeline_mode<synchronous>, transform_indices = @transform_3, window_bounds = array<i64: 2, 32>}, {pipeline_mode = #tpu.pipeline_mode<synchronous>, transform_indices = @transform_4, window_bounds = array<i64: 1, 32>}, {transform_indices = @transform_5, window_bounds = array<i64: 2, 32, 256>}]} {
    %c0 = arith.constant 0 : index
    %c0_0 = arith.constant 0 : index
    %c0_1 = arith.constant 0 : index
    %0 = vector.load %arg1[%c0, %c0_0, %c0_1] : memref<2x32x256xf32, #tpu.memory_space<vmem>>, vector<2x32x256xf32>
    %cst = arith.constant dense<0.000000e+00> : vector<2x32xf32>
    %1 = vector.multi_reduction <add>, %0, %cst [2] : vector<2x32x256xf32> to vector<2x32xf32>
    %cst_2 = arith.constant 3.906250e-03 : f32
    %2 = vector.broadcast %cst_2 : f32 to vector<2x32xf32>
    %3 = arith.mulf %1, %2 : vector<2x32xf32>
    %c0_3 = arith.constant 0 : index
    %c0_4 = arith.constant 0 : index
    %4 = vector.load %arg2[%c0_3, %c0_4] : memref<32x2xf32, #tpu.memory_space<vmem>>, vector<32x2xf32>
    %cst_5 = arith.constant dense<0.000000e+00> : vector<2x2xf32>
    %5 = tpu.matmul %3, %4, %cst_5 {dimension_numbers = #tpu.dot_dimension_numbers<[1], [0], [0], [1], [0, 0, 1, 1], [], []>, precision = #tpu.contract_precision<fp32>} : vector<2x32xf32>, vector<32x2xf32>, vector<2x2xf32> -> vector<2x2xf32>
    %c0_6 = arith.constant 0 : index
    %c0_7 = arith.constant 0 : index
    %6 = vector.load %arg3[%c0_6, %c0_7] : memref<1x2xf32, #tpu.memory_space<vmem>>, vector<1x2xf32>
    %7 = vector.broadcast %6 : vector<1x2xf32> to vector<2x2xf32>
    %8 = arith.addf %5, %7 : vector<2x2xf32>
    %cst_8 = arith.constant 0.000000e+00 : f32
    %9 = vector.broadcast %cst_8 : f32 to vector<2x2xf32>
    %10 = arith.maximumf %8, %9 : vector<2x2xf32>
    %c0_9 = arith.constant 0 : index
    %c0_10 = arith.constant 0 : index
    %11 = vector.load %arg4[%c0_9, %c0_10] : memref<2x32xf32, #tpu.memory_space<vmem>>, vector<2x32xf32>
    %cst_11 = arith.constant dense<0.000000e+00> : vector<2x32xf32>
    %12 = tpu.matmul %10, %11, %cst_11 {dimension_numbers = #tpu.dot_dimension_numbers<[1], [0], [0], [1], [0, 0, 1, 1], [], []>, precision = #tpu.contract_precision<fp32>} : vector<2x2xf32>, vector<2x32xf32>, vector<2x32xf32> -> vector<2x32xf32>
    %c0_12 = arith.constant 0 : index
    %c0_13 = arith.constant 0 : index
    %13 = vector.load %arg5[%c0_12, %c0_13] : memref<1x32xf32, #tpu.memory_space<vmem>>, vector<1x32xf32>
    %14 = vector.broadcast %13 : vector<1x32xf32> to vector<2x32xf32>
    %15 = arith.addf %12, %14 : vector<2x32xf32>
    %16 = arith.negf %15 : vector<2x32xf32>
    %17 = math.exp %16 : vector<2x32xf32>
    %cst_14 = arith.constant 1.000000e+00 : f32
    %18 = vector.broadcast %cst_14 : f32 to vector<2x32xf32>
    %19 = arith.addf %18, %17 : vector<2x32xf32>
    %20 = arith.divf %18, %19 : vector<2x32xf32>
    %21 = vector.shape_cast %20 : vector<2x32xf32> to vector<2x32x1xf32>
    %22 = vector.broadcast %21 : vector<2x32x1xf32> to vector<2x32x256xf32>
    %23 = arith.mulf %0, %22 : vector<2x32x256xf32>
    %c0_15 = arith.constant 0 : index
    %c0_16 = arith.constant 0 : index
    %c0_17 = arith.constant 0 : index
    %24 = vector.load %arg6[%c0_15, %c0_16, %c0_17] : memref<2x32x256xf32, #tpu.memory_space<vmem>>, vector<2x32x256xf32>
    tpu.vector_store %arg6[%c0_15, %c0_16, %c0_17], %23 {strides = array<i32>} : memref<2x32x256xf32, #tpu.memory_space<vmem>>, vector<2x32x256xf32>,
    return
  }
  func.func @transform_0(%arg0: i32) -> (i32, i32, i32) {
    %c0_i32 = arith.constant 0 : i32
    %c0_i32_0 = arith.constant 0 : i32
    %c0_i32_1 = arith.constant 0 : i32
    return %arg0, %c0_i32, %c0_i32_0 : i32, i32, i32
  }
  func.func @transform_1(%arg0: i32) -> (i32, i32) {
    %c0_i32 = arith.constant 0 : i32
    %c0_i32_0 = arith.constant 0 : i32
    %c0_i32_1 = arith.constant 0 : i32
    return %c0_i32, %c0_i32_0 : i32, i32
  }
  func.func @transform_2(%arg0: i32) -> (i32, i32) {
    %c0_i32 = arith.constant 0 : i32
    %c0_i32_0 = arith.constant 0 : i32
    %c0_i32_1 = arith.constant 0 : i32
    return %c0_i32, %c0_i32_0 : i32, i32
  }
  func.func @transform_3(%arg0: i32) -> (i32, i32) {
    %c0_i32 = arith.constant 0 : i32
    %c0_i32_0 = arith.constant 0 : i32
    %c0_i32_1 = arith.constant 0 : i32
    return %c0_i32, %c0_i32_0 : i32, i32
  }
  func.func @transform_4(%arg0: i32) -> (i32, i32) {
    %c0_i32 = arith.constant 0 : i32
    %c0_i32_0 = arith.constant 0 : i32
    %c0_i32_1 = arith.constant 0 : i32
    return %c0_i32, %c0_i32_0 : i32, i32
  }
  func.func @transform_5(%arg0: i32) -> (i32, i32, i32) {
    %c0_i32 = arith.constant 0 : i32
    %c0_i32_0 = arith.constant 0 : i32
    %c0_i32_1 = arith.constant 0 : i32
    return %arg0, %c0_i32, %c0_i32_0 : i32, i32, i32
  }
}

</mosaic_0001>

<llo_original>
// kernel: tpu_custom_call.1
$region0: #{tpu_custom_call.1}
  #allocation0 [shape = 'u32[]', space=smem, size = 0x4, offset = 0x4, fixed_abs, tag = 'smem constant byte address 0x4 - core index']
  #allocation1 [shape = 'u32[144,128]{1,0:T(1,128)}', space=vmem, size = 0x12000, scoped, tag = 'internal scratch']
  %s0 = inlined_call_operand.hbm [shape: f32[2,32,256], index: 0, kind: input, shape index: {}]
  %s1 = inlined_call_operand.vmem [shape: f32[32,2], index: 1, kind: input, shape index: {}]
  %s2 = inlined_call_operand.vmem [shape: f32[1,2], index: 2, kind: input, shape index: {}]
  %s3 = inlined_call_operand.vmem [shape: f32[2,32], index: 3, kind: input, shape index: {}]
  %s4 = inlined_call_operand.vmem [shape: f32[1,32], index: 4, kind: input, shape index: {}]
  %s5 = inlined_call_operand.hbm [shape: f32[2,32,256], index: 5, kind: output, shape index: {}]
  %s6 = sld [smem:[#allocation0]]
  $region34: #{tpu_custom_call.1} parent=0
    _
  %s8 = ssub.s32 1, %s6
  %s9 = scalar_select 0, %s8, %s6
  $region1: #{tpu_custom_call.1} parent=0
    #allocation2 [shape = 'u8[65536]{0}', space=vmem, size = 0x10000, scoped, tag = 'input window, operand 0, single buffered']
    #allocation3 [shape = 's32[1]{0}', space=sflag, size = 0x4, scoped, tag = 'scoped memory for tpu_custom_call.1']
    #allocation4 [shape = 's32[1]{0}', space=sflag, size = 0x4, scoped, tag = 'scoped memory for tpu_custom_call.1']
    #allocation5 [shape = 'u8[65536]{0}', space=vmem, size = 0x10000, scoped, tag = 'output window, operand 0, single buffered']
    %10 = vsyncpa [#allocation3], 0
    %11 = vsyncpa [#allocation4], 0
    // Predicated region
    $region2: #{tpu_custom_call.1} parent=1 // pred_check
      _
    $region3: #{tpu_custom_call.1} parent=1 // pred_check_branch
      %13 = sbr.rel (0) target = $region5
    $region4: #{tpu_custom_call.1} parent=1 // pred_region
      %s15 = ssub.s32 2048, 2048
      %16 = vsyncadd [#allocation3], %s15
      %s17 = sshll.u32 [#allocation2], 4
      %s18 = int_to_ptr.vmem [resolvable:$true] %s17
      %23 = dma.hbm_to_vmem [thread:$0]  %s0, 2048, %s18, [#allocation3], 256, 256, 16
    $region5: #{tpu_custom_call.1} parent=1 // pred_fallthru
      _
    // Predicated region
    $region6: #{tpu_custom_call.1} parent=1 // pred_check
      _
    $region7: #{tpu_custom_call.1} parent=1 // pred_check_branch
      %25 = sbr.rel (0) target = $region9
    $region8: #{tpu_custom_call.1} parent=1 // pred_region
      _
    $region9: #{tpu_custom_call.1} parent=1 // pred_fallthru
      _
    // Predicated region
    $region10: #{tpu_custom_call.1} parent=1 // pred_check
      _
    $region11: #{tpu_custom_call.1} parent=1 // pred_check_branch
      %27 = sbr.rel (0) target = $region13
    $region12: #{tpu_custom_call.1} parent=1 // pred_region
      _
    $region13: #{tpu_custom_call.1} parent=1 // pred_fallthru
      _
    // Predicated region
    $region14: #{tpu_custom_call.1} parent=1 // pred_check
      _
    $region15: #{tpu_custom_call.1} parent=1 // pred_check_branch
      %29 = sbr.rel (0) target = $region17
    $region16: #{tpu_custom_call.1} parent=1 // pred_region
      _
    $region17: #{tpu_custom_call.1} parent=1 // pred_fallthru
      _
    // Predicated region
    $region18: #{tpu_custom_call.1} parent=1 // pred_check
      _
    $region19: #{tpu_custom_call.1} parent=1 // pred_check_branch
      %31 = sbr.rel (0) target = $region21
    $region20: #{tpu_custom_call.1} parent=1 // pred_region
      _
    $region21: #{tpu_custom_call.1} parent=1 // pred_fallthru
      _
    // Predicated region
    $region22: #{tpu_custom_call.1} parent=1 // pred_check
      _
    $region23: #{tpu_custom_call.1} parent=1 // pred_check_branch
      %33 = sbr.rel (0) target = $region25
    $region24: #{tpu_custom_call.1} parent=1 // pred_region
      %34 = dma.done [#allocation3], 2048
    $region25: #{tpu_custom_call.1} parent=1 // pred_fallthru
      _
    %v35 = vld [vmem:[#allocation2] sm:$0xff]
    %v36 = vld [vmem:[#allocation2 + $0x8] sm:$0xff]
    %v37 = vld [vmem:[#allocation2 + $0x10] sm:$0xff]
    %v38 = vld [vmem:[#allocation2 + $0x18] sm:$0xff]
    %v39 = vld [vmem:[#allocation2 + $0x20] sm:$0xff]
    %v40 = vld [vmem:[#allocation2 + $0x28] sm:$0xff]
    %v41 = vld [vmem:[#allocation2 + $0x30] sm:$0xff]
    %v42 = vld [vmem:[#allocation2 + $0x38] sm:$0xff]
    %v43 = vld [vmem:[#allocation2 + $0x40] sm:$0xff]
    %v44 = vld [vmem:[#allocation2 + $0x48] sm:$0xff]
    %v45 = vld [vmem:[#allocation2 + $0x50] sm:$0xff]
    %v46 = vld [vmem:[#allocation2 + $0x58] sm:$0xff]
    %v47 = vld [vmem:[#allocation2 + $0x60] sm:$0xff]
    %v48 = vld [vmem:[#allocation2 + $0x68] sm:$0xff]
    %v49 = vld [vmem:[#allocation2 + $0x70] sm:$0xff]
    %v50 = vld [vmem:[#allocation2 + $0x78] sm:$0xff]
    %v51 = vadd.f32 %v35, %v36
    %52 = vadd.xlane.f32.xlu0 %v51
    %v53 = vpop.xlane.xlu0 %52
    %v54 = vadd.f32 %v37, %v38
    %55 = vadd.xlane.f32.xlu0 %v54
    %v56 = vpop.xlane.xlu0 %55
    %v57 = vadd.f32 %v39, %v40
    %58 = vadd.xlane.f32.xlu0 %v57
    %v59 = vpop.xlane.xlu0 %58
    %v60 = vadd.f32 %v41, %v42
    %61 = vadd.xlane.f32.xlu0 %v60
    %v62 = vpop.xlane.xlu0 %61
    %v63 = vadd.f32 %v43, %v44
    %64 = vadd.xlane.f32.xlu0 %v63
    %v65 = vpop.xlane.xlu0 %64
    %v66 = vadd.f32 %v45, %v46
    %67 = vadd.xlane.f32.xlu0 %v66
    %v68 = vpop.xlane.xlu0 %67
    %v69 = vadd.f32 %v47, %v48
    %70 = vadd.xlane.f32.xlu0 %v69
    %v71 = vpop.xlane.xlu0 %70
    %v72 = vadd.f32 %v49, %v50
    %73 = vadd.xlane.f32.xlu0 %v72
    %v74 = vpop.xlane.xlu0 %73
    %v75 = vmul.f32 %v53, 0.00390625
    %v76 = vmul.f32 %v56, 0.00390625
    %v77 = vmul.f32 %v59, 0.00390625
    %v78 = vmul.f32 %v62, 0.00390625
    %v79 = vmul.f32 %v65, 0.00390625
    %v80 = vmul.f32 %v68, 0.00390625
    %v81 = vmul.f32 %v71, 0.00390625
    %v82 = vmul.f32 %v74, 0.00390625
    %v83 = vld [vmem:[%s1] sm:$0xff]
    %v84 = vld [vmem:[%s1 + $0x8] sm:$0xff]
    %v85 = vld [vmem:[%s1 + $0x10] sm:$0xff]
    %v86 = vld [vmem:[%s1 + $0x18] sm:$0xff]
    %v87 = vld [vmem:[%s2] sm:$0x1]
    %v89 = vlaneseq
    %v90 = vshrl.u32 %v89, 7
    %v91 = vsub.s32 0, %v90
    %v92 = vrot.slane %v87, %v91
    %v102 = vlaneseq
    %v103 = vand.u32 %v102, 127
    %v104 = vlaneseq
    %v105 = vshrl.u32 %v104, 7
    %v106 = vsub.s32 %v103, %v105
    %v107 = vrot.slane %v75, %v106
    %v108 = vadd.s32 %v103, 4294967288
    %v109 = vlaneseq
    %v110 = vshrl.u32 %v109, 7
    %v111 = vsub.s32 %v108, %v110
    %v112 = vrot.slane %v76, %v111
    %vm113 = vcmask 130112
    %v114 = vsel %vm113, %v112, %v107
    %v115 = vadd.s32 %v103, 4294967280
    %v116 = vlaneseq
    %v117 = vshrl.u32 %v116, 7
    %v118 = vsub.s32 %v115, %v117
    %v119 = vrot.slane %v77, %v118
    %vm120 = vcmask 195712
    %v121 = vsel %vm120, %v119, %v114
    %v122 = vadd.s32 %v103, 4294967272
    %v123 = vlaneseq
    %v124 = vshrl.u32 %v123, 7
    %v125 = vsub.s32 %v122, %v124
    %v126 = vrot.slane %v78, %v125
    %vm127 = vcmask 261312
    %v128 = vsel %vm127, %v126, %v121
    %v129 = vlaneseq
    %v130 = vshrl.u32 %v129, 7
    %v131 = vsub.s32 %v103, %v130
    %v132 = vrot.slane %v79, %v131
    %v133 = vlaneseq
    %v134 = vshrl.u32 %v133, 7
    %v135 = vsub.s32 %v108, %v134
    %v136 = vrot.slane %v80, %v135
    %v137 = vsel %vm113, %v136, %v132
    %v138 = vlaneseq
    %v139 = vshrl.u32 %v138, 7
    %v140 = vsub.s32 %v115, %v139
    %v141 = vrot.slane %v81, %v140
    %v142 = vsel %vm120, %v141, %v137
    %v143 = vlaneseq
    %v144 = vshrl.u32 %v143, 7
    %v145 = vsub.s32 %v122, %v144
    %v146 = vrot.slane %v82, %v145
    %v147 = vsel %vm127, %v146, %v142
    %vm148 = vcmask 1041409
    %v149 = vsel %vm148, %v147, %v128
    %vm150 = vcmask 261120
    %v151 = vsel %vm150, %v149, 0
    %153 = vmatprep.subr.mxu0 0.0
    %v154 = vand.u32 %v83, 4294901760
    %155 = vmatpush1.msra.mxu0 %v154
    %156 = vmatprep.subr.mxu0 0.0
    %v157 = vand.u32 %v84, 4294901760
    %158 = vmatpush1.msra.mxu0 %v157
    %159 = vmatprep.subr.mxu0 0.0
    %v160 = vand.u32 %v85, 4294901760
    %161 = vmatpush1.msra.mxu0 %v160
    %162 = vmatprep.subr.mxu0 0.0
    %v163 = vand.u32 %v86, 4294901760
    %164 = vmatpush1.msra.mxu0 %v163
    %165 = vmatprep.subr.mxu0 0.0
    %166 = vmatpush1.msra.mxu0 0.0
    %167 = vmatprep.subr.mxu0 0.0
    %168 = vmatpush1.msra.mxu0 0.0
    %169 = vmatprep.subr.mxu0 0.0
    %170 = vmatpush1.msra.mxu0 0.0
    %171 = vmatprep.subr.mxu0 0.0
    %172 = vmatpush1.msra.mxu0 0.0
    %173 = vmatprep.subr.mxu0 0.0
    %174 = vmatpush1.msra.mxu0 0.0
    %175 = vmatprep.subr.mxu0 0.0
    %176 = vmatpush1.msra.mxu0 0.0
    %177 = vmatprep.subr.mxu0 0.0
    %178 = vmatpush1.msra.mxu0 0.0
    %179 = vmatprep.subr.mxu0 0.0
    %180 = vmatpush1.msra.mxu0 0.0
    %181 = vmatprep.subr.mxu0 0.0
    %182 = vmatpush1.msra.mxu0 0.0
    %183 = vmatprep.subr.mxu0 0.0
    %184 = vmatpush1.msra.mxu0 0.0
    %185 = vmatprep.subr.mxu0 0.0
    %186 = vmatpush1.msra.mxu0 0.0
    %187 = vmatprep.subr.mxu0 0.0
    %188 = vmatpush1.msra.mxu0 0.0
    %189 = vmatprep.subr.mxu0 0.0
    %190 = vmatpush1.msra.mxu0 0.0
    %191 = vmatprep.subr.mxu0 0.0
    %192 = vmatpush1.msra.mxu0 0.0
    %193 = vmatprep.subr.mxu0 0.0
    %194 = vmatpush1.msra.mxu0 0.0
    %195 = vmatprep.subr.mxu0 0.0
    %196 = vmatpush1.msra.mxu0 0.0
    %197 = vmatprep.subr.mxu0 0.0
    %198 = vmatpush1.msra.mxu0 0.0
    %199 = vmatprep.subr.mxu0 0.0
    %200 = vmatpush1.msra.mxu0 0.0
    %201 = vmatprep.subr.mxu0 0.0
    %202 = vmatpush1.msra.mxu0 0.0
    %203 = vmatprep.subr.mxu0 0.0
    %204 = vmatpush1.msra.mxu0 0.0
    %205 = vmatprep.subr.mxu0 0.0
    %206 = vmatpush1.msra.mxu0 0.0
    %207 = vmatprep.subr.mxu0 0.0
    %208 = vmatpush1.msra.mxu0 0.0
    %209 = vmatprep.subr.mxu0 0.0
    %210 = vmatpush1.msra.mxu0 0.0
    %211 = vmatprep.subr.mxu0 0.0
    %212 = vmatpush1.msra.mxu0 0.0
    %213 = vmatprep.subr.mxu0 0.0
    %214 = vmatpush1.msra.mxu0 0.0
    %215 = vmatprep.subr.mxu0 0.0
    %216 = vmatpush1.msra.mxu0 0.0
    %217 = vmatprep.subr.mxu0 0.0
    %218 = vmatpush1.msra.mxu0 0.0
    %219 = vmatprep.subr.mxu0 0.0
    %220 = vmatpush1.msra.mxu0 0.0
    %221 = vmatprep.mubr.f32.mxu0 0.0
    %v222 = vand.u32 %v151, 4294901760
    %v223 = vsub.f32 %v151, %v222
    %v224 = vand.u32 %v223, 4294901760
    %v225 = vsub.f32 %v223, %v224
    %v226 = vand.u32 %v225, 4294901760
    %227 = vmatmul.mubr.f32.gmra.mrb[0].mxu0 %v226
    %v228 = vpop.f32.mrb[0].mxu0
    %v229 = vadd.f32 %v92, %v228
    %v230 = vpop.f32.mrb[0].mxu0
    %231 = vdwg.mxu0
    %232 = vmatprep.subr.mxu0 0.0
    %v233 = vand.u32 %v83, 4294901760
    %v234 = vsub.f32 %v83, %v233
    %v235 = vand.u32 %v234, 4294901760
    %v236 = vsub.f32 %v234, %v235
    %v237 = vand.u32 %v236, 4294901760
    %238 = vmatpush1.msra.mxu0 %v237
    %239 = vmatprep.subr.mxu0 0.0
    %v240 = vand.u32 %v84, 4294901760
    %v241 = vsub.f32 %v84, %v240
    %v242 = vand.u32 %v241, 4294901760
    %v243 = vsub.f32 %v241, %v242
    %v244 = vand.u32 %v243, 4294901760
    %245 = vmatpush1.msra.mxu0 %v244
    %246 = vmatprep.subr.mxu0 0.0
    %v247 = vand.u32 %v85, 4294901760
    %v248 = vsub.f32 %v85, %v247
    %v249 = vand.u32 %v248, 4294901760
    %v250 = vsub.f32 %v248, %v249
    %v251 = vand.u32 %v250, 4294901760
    %252 = vmatpush1.msra.mxu0 %v251
    %253 = vmatprep.subr.mxu0 0.0
    %v254 = vand.u32 %v86, 4294901760
    %v255 = vsub.f32 %v86, %v254
    %v256 = vand.u32 %v255, 4294901760
    %v257 = vsub.f32 %v255, %v256
    %v258 = vand.u32 %v257, 4294901760
    %259 = vmatpush1.msra.mxu0 %v258
    %260 = vmatprep.subr.mxu0 0.0
    %261 = vmatpush1.msra.mxu0 0.0
    %262 = vmatprep.subr.mxu0 0.0
    %263 = vmatpush1.msra.mxu0 0.0
    %264 = vmatprep.subr.mxu0 0.0
    %265 = vmatpush1.msra.mxu0 0.0
    %266 = vmatprep.subr.mxu0 0.0
    %267 = vmatpush1.msra.mxu0 0.0
    %268 = vmatprep.subr.mxu0 0.0
    %269 = vmatpush1.msra.mxu0 0.0
    %270 = vmatprep.subr.mxu0 0.0
    %271 = vmatpush1.msra.mxu0 0.0
    %272 = vmatprep.subr.mxu0 0.0
    %273 = vmatpush1.msra.mxu0 0.0
    %274 = vmatprep.subr.mxu0 0.0
    %275 = vmatpush1.msra.mxu0 0.0
    %276 = vmatprep.subr.mxu0 0.0
    %277 = vmatpush1.msra.mxu0 0.0
    %278 = vmatprep.subr.mxu0 0.0
    %279 = vmatpush1.msra.mxu0 0.0
    %280 = vmatprep.subr.mxu0 0.0
    %281 = vmatpush1.msra.mxu0 0.0
    %282 = vmatprep.subr.mxu0 0.0
    %283 = vmatpush1.msra.mxu0 0.0
    %284 = vmatprep.subr.mxu0 0.0
    %285 = vmatpush1.msra.mxu0 0.0
    %286 = vmatprep.subr.mxu0 0.0
    %287 = vmatpush1.msra.mxu0 0.0
    %288 = vmatprep.subr.mxu0 0.0
    %289 = vmatpush1.msra.mxu0 0.0
    %290 = vmatprep.subr.mxu0 0.0
    %291 = vmatpush1.msra.mxu0 0.0
    %292 = vmatprep.subr.mxu0 0.0
    %293 = vmatpush1.msra.mxu0 0.0
    %294 = vmatprep.subr.mxu0 0.0
    %295 = vmatpush1.msra.mxu0 0.0
    %296 = vmatprep.subr.mxu0 0.0
    %297 = vmatpush1.msra.mxu0 0.0
    %298 = vmatprep.subr.mxu0 0.0
    %299 = vmatpush1.msra.mxu0 0.0
    %300 = vmatprep.subr.mxu0 0.0
    %301 = vmatpush1.msra.mxu0 0.0
    %302 = vmatprep.subr.mxu0 0.0
    %303 = vmatpush1.msra.mxu0 0.0
    %304 = vmatprep.subr.mxu0 0.0
    %305 = vmatpush1.msra.mxu0 0.0
    %306 = vmatprep.subr.mxu0 0.0
    %307 = vmatpush1.msra.mxu0 0.0
    %308 = vmatprep.subr.mxu0 0.0
    %309 = vmatpush1.msra.mxu0 0.0
    %310 = vmatprep.subr.mxu0 0.0
    %311 = vmatpush1.msra.mxu0 0.0
    %312 = vmatprep.subr.mxu0 0.0
    %313 = vmatpush1.msra.mxu0 0.0
    %314 = vmatprep.subr.mxu0 0.0
    %315 = vmatpush1.msra.mxu0 0.0
    %316 = vmatprep.mubr.f32.mxu0 0.0
    %v317 = vand.u32 %v151, 4294901760
    %318 = vmatmul.mubr.f32.gmra.mrb[0].mxu0 %v317
    %v319 = vpop.f32.mrb[0].mxu0
    %v320 = vadd.f32 %v229, %v319
    %v321 = vpop.f32.mrb[0].mxu0
    %322 = vdwg.mxu0
    %323 = vmatprep.subr.mxu0 0.0
    %v324 = vand.u32 %v83, 4294901760
    %v325 = vsub.f32 %v83, %v324
    %326 = vmatpush1.msra.mxu0 %v325
    %327 = vmatprep.subr.mxu0 0.0
    %v328 = vand.u32 %v84, 4294901760
    %v329 = vsub.f32 %v84, %v328
    %330 = vmatpush1.msra.mxu0 %v329
    %331 = vmatprep.subr.mxu0 0.0
    %v332 = vand.u32 %v85, 4294901760
    %v333 = vsub.f32 %v85, %v332
    %334 = vmatpush1.msra.mxu0 %v333
    %335 = vmatprep.subr.mxu0 0.0
    %v336 = vand.u32 %v86, 4294901760
    %v337 = vsub.f32 %v86, %v336
    %338 = vmatpush1.msra.mxu0 %v337
    %339 = vmatprep.subr.mxu0 0.0
    %340 = vmatpush1.msra.mxu0 0.0
    %341 = vmatprep.subr.mxu0 0.0
    %342 = vmatpush1.msra.mxu0 0.0
    %343 = vmatprep.subr.mxu0 0.0
    %344 = vmatpush1.msra.mxu0 0.0
    %345 = vmatprep.subr.mxu0 0.0
    %346 = vmatpush1.msra.mxu0 0.0
    %347 = vmatprep.subr.mxu0 0.0
    %348 = vmatpush1.msra.mxu0 0.0
    %349 = vmatprep.subr.mxu0 0.0
    %350 = vmatpush1.msra.mxu0 0.0
    %351 = vmatprep.subr.mxu0 0.0
    %352 = vmatpush1.msra.mxu0 0.0
    %353 = vmatprep.subr.mxu0 0.0
    %354 = vmatpush1.msra.mxu0 0.0
    %355 = vmatprep.subr.mxu0 0.0
    %356 = vmatpush1.msra.mxu0 0.0
    %357 = vmatprep.subr.mxu0 0.0
    %358 = vmatpush1.msra.mxu0 0.0
    %359 = vmatprep.subr.mxu0 0.0
    %360 = vmatpush1.msra.mxu0 0.0
    %361 = vmatprep.subr.mxu0 0.0
    %362 = vmatpush1.msra.mxu0 0.0
    %363 = vmatprep.subr.mxu0 0.0
    %364 = vmatpush1.msra.mxu0 0.0
    %365 = vmatprep.subr.mxu0 0.0
    %366 = vmatpush1.msra.mxu0 0.0
    %367 = vmatprep.subr.mxu0 0.0
    %368 = vmatpush1.msra.mxu0 0.0
    %369 = vmatprep.subr.mxu0 0.0
    %370 = vmatpush1.msra.mxu0 0.0
    %371 = vmatprep.subr.mxu0 0.0
    %372 = vmatpush1.msra.mxu0 0.0
    %373 = vmatprep.subr.mxu0 0.0
    %374 = vmatpush1.msra.mxu0 0.0
    %375 = vmatprep.subr.mxu0 0.0
    %376 = vmatpush1.msra.mxu0 0.0
    %377 = vmatprep.subr.mxu0 0.0
    %378 = vmatpush1.msra.mxu0 0.0
    %379 = vmatprep.subr.mxu0 0.0
    %380 = vmatpush1.msra.mxu0 0.0
    %381 = vmatprep.subr.mxu0 0.0
    %382 = vmatpush1.msra.mxu0 0.0
    %383 = vmatprep.subr.mxu0 0.0
    %384 = vmatpush1.msra.mxu0 0.0
    %385 = vmatprep.subr.mxu0 0.0
    %386 = vmatpush1.msra.mxu0 0.0
    %387 = vmatprep.subr.mxu0 0.0
    %388 = vmatpush1.msra.mxu0 0.0
    %389 = vmatprep.subr.mxu0 0.0
    %390 = vmatpush1.msra.mxu0 0.0
    %391 = vmatprep.subr.mxu0 0.0
    %392 = vmatpush1.msra.mxu0 0.0
    %393 = vmatprep.subr.mxu0 0.0
    %394 = vmatpush1.msra.mxu0 0.0
    %395 = vmatprep.mubr.f32.mxu0 0.0
    %v396 = vand.u32 %v151, 4294901760
    %v397 = vsub.f32 %v151, %v396
    %398 = vmatmul.mubr.f32.gmra.mrb[0].mxu0 %v397
    %v399 = vpop.f32.mrb[0].mxu0
    %v400 = vadd.f32 %v320, %v399
    %v401 = vpop.f32.mrb[0].mxu0
    %402 = vdwg.mxu0
    %403 = vmatprep.subr.mxu0 0.0
    %v404 = vand.u32 %v83, 4294901760
    %405 = vmatpush1.msra.mxu0 %v404
    %406 = vmatprep.subr.mxu0 0.0
    %v407 = vand.u32 %v84, 4294901760
    %408 = vmatpush1.msra.mxu0 %v407
    %409 = vmatprep.subr.mxu0 0.0
    %v410 = vand.u32 %v85, 4294901760
    %411 = vmatpush1.msra.mxu0 %v410
    %412 = vmatprep.subr.mxu0 0.0
    %v413 = vand.u32 %v86, 4294901760
    %414 = vmatpush1.msra.mxu0 %v413
    %415 = vmatprep.subr.mxu0 0.0
    %416 = vmatpush1.msra.mxu0 0.0
    %417 = vmatprep.subr.mxu0 0.0
    %418 = vmatpush1.msra.mxu0 0.0
    %419 = vmatprep.subr.mxu0 0.0
    %420 = vmatpush1.msra.mxu0 0.0
    %421 = vmatprep.subr.mxu0 0.0
    %422 = vmatpush1.msra.mxu0 0.0
    %423 = vmatprep.subr.mxu0 0.0
    %424 = vmatpush1.msra.mxu0 0.0
    %425 = vmatprep.subr.mxu0 0.0
    %426 = vmatpush1.msra.mxu0 0.0
    %427 = vmatprep.subr.mxu0 0.0
    %428 = vmatpush1.msra.mxu0 0.0
    %429 = vmatprep.subr.mxu0 0.0
    %430 = vmatpush1.msra.mxu0 0.0
    %431 = vmatprep.subr.mxu0 0.0
    %432 = vmatpush1.msra.mxu0 0.0
    %433 = vmatprep.subr.mxu0 0.0
    %434 = vmatpush1.msra.mxu0 0.0
    %435 = vmatprep.subr.mxu0 0.0
    %436 = vmatpush1.msra.mxu0 0.0
    %437 = vmatprep.subr.mxu0 0.0
    %438 = vmatpush1.msra.mxu0 0.0
    %439 = vmatprep.subr.mxu0 0.0
    %440 = vmatpush1.msra.mxu0 0.0
    %441 = vmatprep.subr.mxu0 0.0
    %442 = vmatpush1.msra.mxu0 0.0
    %443 = vmatprep.subr.mxu0 0.0
    %444 = vmatpush1.msra.mxu0 0.0
    %445 = vmatprep.subr.mxu0 0.0
    %446 = vmatpush1.msra.mxu0 0.0
    %447 = vmatprep.subr.mxu0 0.0
    %448 = vmatpush1.msra.mxu0 0.0
    %449 = vmatprep.subr.mxu0 0.0
    %450 = vmatpush1.msra.mxu0 0.0
    %451 = vmatprep.subr.mxu0 0.0
    %452 = vmatpush1.msra.mxu0 0.0
    %453 = vmatprep.subr.mxu0 0.0
    %454 = vmatpush1.msra.mxu0 0.0
    %455 = vmatprep.subr.mxu0 0.0
    %456 = vmatpush1.msra.mxu0 0.0
    %457 = vmatprep.subr.mxu0 0.0
    %458 = vmatpush1.msra.mxu0 0.0
    %459 = vmatprep.subr.mxu0 0.0
    %460 = vmatpush1.msra.mxu0 0.0
    %461 = vmatprep.subr.mxu0 0.0
    %462 = vmatpush1.msra.mxu0 0.0
    %463 = vmatprep.subr.mxu0 0.0
    %464 = vmatpush1.msra.mxu0 0.0
    %465 = vmatprep.subr.mxu0 0.0
    %466 = vmatpush1.msra.mxu0 0.0
    %467 = vmatprep.subr.mxu0 0.0
    %468 = vmatpush1.msra.mxu0 0.0
    %469 = vmatprep.subr.mxu0 0.0
    %470 = vmatpush1.msra.mxu0 0.0
    %471 = vmatprep.mubr.f32.mxu0 0.0
    %v472 = vand.u32 %v151, 4294901760
    %v473 = vsub.f32 %v151, %v472
    %v474 = vand.u32 %v473, 4294901760
    %475 = vmatmul.mubr.f32.gmra.mrb[0].mxu0 %v474
    %v476 = vpop.f32.mrb[0].mxu0
    %v477 = vadd.f32 %v400, %v476
    %v478 = vpop.f32.mrb[0].mxu0
    %479 = vdwg.mxu0
    %480 = vmatprep.subr.mxu0 0.0
    %v481 = vand.u32 %v83, 4294901760
    %v482 = vsub.f32 %v83, %v481
    %v483 = vand.u32 %v482, 4294901760
    %484 = vmatpush1.msra.mxu0 %v483
    %485 = vmatprep.subr.mxu0 0.0
    %v486 = vand.u32 %v84, 4294901760
    %v487 = vsub.f32 %v84, %v486
    %v488 = vand.u32 %v487, 4294901760
    %489 = vmatpush1.msra.mxu0 %v488
    %490 = vmatprep.subr.mxu0 0.0
    %v491 = vand.u32 %v85, 4294901760
    %v492 = vsub.f32 %v85, %v491
    %v493 = vand.u32 %v492, 4294901760
    %494 = vmatpush1.msra.mxu0 %v493
    %495 = vmatprep.subr.mxu0 0.0
    %v496 = vand.u32 %v86, 4294901760
    %v497 = vsub.f32 %v86, %v496
    %v498 = vand.u32 %v497, 4294901760
    %499 = vmatpush1.msra.mxu0 %v498
    %500 = vmatprep.subr.mxu0 0.0
    %501 = vmatpush1.msra.mxu0 0.0
    %502 = vmatprep.subr.mxu0 0.0
    %503 = vmatpush1.msra.mxu0 0.0
    %504 = vmatprep.subr.mxu0 0.0
    %505 = vmatpush1.msra.mxu0 0.0
    %506 = vmatprep.subr.mxu0 0.0
    %507 = vmatpush1.msra.mxu0 0.0
    %508 = vmatprep.subr.mxu0 0.0
    %509 = vmatpush1.msra.mxu0 0.0
    %510 = vmatprep.subr.mxu0 0.0
    %511 = vmatpush1.msra.mxu0 0.0
    %512 = vmatprep.subr.mxu0 0.0
    %513 = vmatpush1.msra.mxu0 0.0
    %514 = vmatprep.subr.mxu0 0.0
    %515 = vmatpush1.msra.mxu0 0.0
    %516 = vmatprep.subr.mxu0 0.0
    %517 = vmatpush1.msra.mxu0 0.0
    %518 = vmatprep.subr.mxu0 0.0
    %519 = vmatpush1.msra.mxu0 0.0
    %520 = vmatprep.subr.mxu0 0.0
    %521 = vmatpush1.msra.mxu0 0.0
    %522 = vmatprep.subr.mxu0 0.0
    %523 = vmatpush1.msra.mxu0 0.0
    %524 = vmatprep.subr.mxu0 0.0
    %525 = vmatpush1.msra.mxu0 0.0
    %526 = vmatprep.subr.mxu0 0.0
    %527 = vmatpush1.msra.mxu0 0.0
    %528 = vmatprep.subr.mxu0 0.0
    %529 = vmatpush1.msra.mxu0 0.0
    %530 = vmatprep.subr.mxu0 0.0
    %531 = vmatpush1.msra.mxu0 0.0
    %532 = vmatprep.subr.mxu0 0.0
    %533 = vmatpush1.msra.mxu0 0.0
    %534 = vmatprep.subr.mxu0 0.0
    %535 = vmatpush1.msra.mxu0 0.0
    %536 = vmatprep.subr.mxu0 0.0
    %537 = vmatpush1.msra.mxu0 0.0
    %538 = vmatprep.subr.mxu0 0.0
    %539 = vmatpush1.msra.mxu0 0.0
    %540 = vmatprep.subr.mxu0 0.0
    %541 = vmatpush1.msra.mxu0 0.0
    %542 = vmatprep.subr.mxu0 0.0
    %543 = vmatpush1.msra.mxu0 0.0
    %544 = vmatprep.subr.mxu0 0.0
    %545 = vmatpush1.msra.mxu0 0.0
    %546 = vmatprep.subr.mxu0 0.0
    %547 = vmatpush1.msra.mxu0 0.0
    %548 = vmatprep.subr.mxu0 0.0
    %549 = vmatpush1.msra.mxu0 0.0
    %550 = vmatprep.subr.mxu0 0.0
    %551 = vmatpush1.msra.mxu0 0.0
    %552 = vmatprep.subr.mxu0 0.0
    %553 = vmatpush1.msra.mxu0 0.0
    %554 = vmatprep.subr.mxu0 0.0
    %555 = vmatpush1.msra.mxu0 0.0
    %556 = vmatprep.mubr.f32.mxu0 0.0
    %v557 = vand.u32 %v151, 4294901760
    %558 = vmatmul.mubr.f32.gmra.mrb[0].mxu0 %v557
    %v559 = vpop.f32.mrb[0].mxu0
    %v560 = vadd.f32 %v477, %v559
    %v561 = vpop.f32.mrb[0].mxu0
    %562 = vdwg.mxu0
    %563 = vmatprep.subr.mxu0 0.0
    %v564 = vand.u32 %v83, 4294901760
    %565 = vmatpush1.msra.mxu0 %v564
    %566 = vmatprep.subr.mxu0 0.0
    %v567 = vand.u32 %v84, 4294901760
    %568 = vmatpush1.msra.mxu0 %v567
    %569 = vmatprep.subr.mxu0 0.0
    %v570 = vand.u32 %v85, 4294901760
    %571 = vmatpush1.msra.mxu0 %v570
    %572 = vmatprep.subr.mxu0 0.0
    %v573 = vand.u32 %v86, 4294901760
    %574 = vmatpush1.msra.mxu0 %v573
    %575 = vmatprep.subr.mxu0 0.0
    %576 = vmatpush1.msra.mxu0 0.0
    %577 = vmatprep.subr.mxu0 0.0
    %578 = vmatpush1.msra.mxu0 0.0
    %579 = vmatprep.subr.mxu0 0.0
    %580 = vmatpush1.msra.mxu0 0.0
    %581 = vmatprep.subr.mxu0 0.0
    %582 = vmatpush1.msra.mxu0 0.0
    %583 = vmatprep.subr.mxu0 0.0
    %584 = vmatpush1.msra.mxu0 0.0
    %585 = vmatprep.subr.mxu0 0.0
    %586 = vmatpush1.msra.mxu0 0.0
    %587 = vmatprep.subr.mxu0 0.0
    %588 = vmatpush1.msra.mxu0 0.0
    %589 = vmatprep.subr.mxu0 0.0
    %590 = vmatpush1.msra.mxu0 0.0
    %591 = vmatprep.subr.mxu0 0.0
    %592 = vmatpush1.msra.mxu0 0.0
    %593 = vmatprep.subr.mxu0 0.0
    %594 = vmatpush1.msra.mxu0 0.0
    %595 = vmatprep.subr.mxu0 0.0
    %596 = vmatpush1.msra.mxu0 0.0
    %597 = vmatprep.subr.mxu0 0.0
    %598 = vmatpush1.msra.mxu0 0.0
    %599 = vmatprep.subr.mxu0 0.0
    %600 = vmatpush1.msra.mxu0 0.0
    %601 = vmatprep.subr.mxu0 0.0
    %602 = vmatpush1.msra.mxu0 0.0
    %603 = vmatprep.subr.mxu0 0.0
    %604 = vmatpush1.msra.mxu0 0.0
    %605 = vmatprep.subr.mxu0 0.0
    %606 = vmatpush1.msra.mxu0 0.0
    %607 = vmatprep.subr.mxu0 0.0
    %608 = vmatpush1.msra.mxu0 0.0
    %609 = vmatprep.subr.mxu0 0.0
    %610 = vmatpush1.msra.mxu0 0.0
    %611 = vmatprep.subr.mxu0 0.0
    %612 = vmatpush1.msra.mxu0 0.0
    %613 = vmatprep.subr.mxu0 0.0
    %614 = vmatpush1.msra.mxu0 0.0
    %615 = vmatprep.subr.mxu0 0.0
    %616 = vmatpush1.msra.mxu0 0.0
    %617 = vmatprep.subr.mxu0 0.0
    %618 = vmatpush1.msra.mxu0 0.0
    %619 = vmatprep.subr.mxu0 0.0
    %620 = vmatpush1.msra.mxu0 0.0
    %621 = vmatprep.subr.mxu0 0.0
    %622 = vmatpush1.msra.mxu0 0.0
    %623 = vmatprep.subr.mxu0 0.0
    %624 = vmatpush1.msra.mxu0 0.0
    %625 = vmatprep.subr.mxu0 0.0
    %626 = vmatpush1.msra.mxu0 0.0
    %627 = vmatprep.subr.mxu0 0.0
    %628 = vmatpush1.msra.mxu0 0.0
    %629 = vmatprep.subr.mxu0 0.0
    %630 = vmatpush1.msra.mxu0 0.0
    %631 = vmatprep.mubr.f32.mxu0 0.0
    %v632 = vand.u32 %v151, 4294901760
    %633 = vmatmul.mubr.f32.gmra.mrb[0].mxu0 %v632
    %v634 = vpop.f32.mrb[0].mxu0
    %v635 = vadd.f32 %v560, %v634
    %v636 = vpop.f32.mrb[0].mxu0
    %637 = vdwg.mxu0
    %v638 = vmax.f32 %v635, 0.0
    %v639 = vld [vmem:[%s3] sm:$0x3]
    %v640 = vld [vmem:[%s4] sm:$0x1]
    %v642 = vlaneseq
    %v643 = vshrl.u32 %v642, 7
    %v644 = vsub.s32 0, %v643
    %v645 = vrot.slane %v640, %v644
    %vm647 = vcmask 15360
    %v649 = vsel %vm647, %v638, 0
    %vm651 = vcmask 1041408
    %v653 = vsel %vm651, %v639, 0
    %655 = vmatprep.subr.mxu0 0.0
    %v656 = vand.u32 %v653, 4294901760
    %657 = vmatpush1.msra.mxu0 %v656
    %658 = vmatprep.subr.mxu0 0.0
    %659 = vmatpush1.msra.mxu0 0.0
    %660 = vmatprep.subr.mxu0 0.0
    %661 = vmatpush1.msra.mxu0 0.0
    %662 = vmatprep.subr.mxu0 0.0
    %663 = vmatpush1.msra.mxu0 0.0
    %664 = vmatprep.subr.mxu0 0.0
    %665 = vmatpush1.msra.mxu0 0.0
    %666 = vmatprep.subr.mxu0 0.0
    %667 = vmatpush1.msra.mxu0 0.0
    %668 = vmatprep.subr.mxu0 0.0
    %669 = vmatpush1.msra.mxu0 0.0
    %670 = vmatprep.subr.mxu0 0.0
    %671 = vmatpush1.msra.mxu0 0.0
    %672 = vmatprep.subr.mxu0 0.0
    %673 = vmatpush1.msra.mxu0 0.0
    %674 = vmatprep.subr.mxu0 0.0
    %675 = vmatpush1.msra.mxu0 0.0
    %676 = vmatprep.subr.mxu0 0.0
    %677 = vmatpush1.msra.mxu0 0.0
    %678 = vmatprep.subr.mxu0 0.0
    %679 = vmatpush1.msra.mxu0 0.0
    %680 = vmatprep.subr.mxu0 0.0
    %681 = vmatpush1.msra.mxu0 0.0
    %682 = vmatprep.subr.mxu0 0.0
    %683 = vmatpush1.msra.mxu0 0.0
    %684 = vmatprep.subr.mxu0 0.0
    %685 = vmatpush1.msra.mxu0 0.0
    %686 = vmatprep.subr.mxu0 0.0
    %687 = vmatpush1.msra.mxu0 0.0
    %688 = vmatprep.subr.mxu0 0.0
    %689 = vmatpush1.msra.mxu0 0.0
    %690 = vmatprep.subr.mxu0 0.0
    %691 = vmatpush1.msra.mxu0 0.0
    %692 = vmatprep.subr.mxu0 0.0
    %693 = vmatpush1.msra.mxu0 0.0
    %694 = vmatprep.subr.mxu0 0.0
    %695 = vmatpush1.msra.mxu0 0.0
    %696 = vmatprep.subr.mxu0 0.0
    %697 = vmatpush1.msra.mxu0 0.0
    %698 = vmatprep.subr.mxu0 0.0
    %699 = vmatpush1.msra.mxu0 0.0
    %700 = vmatprep.subr.mxu0 0.0
    %701 = vmatpush1.msra.mxu0 0.0
    %702 = vmatprep.subr.mxu0 0.0
    %703 = vmatpush1.msra.mxu0 0.0
    %704 = vmatprep.subr.mxu0 0.0
    %705 = vmatpush1.msra.mxu0 0.0
    %706 = vmatprep.subr.mxu0 0.0
    %707 = vmatpush1.msra.mxu0 0.0
    %708 = vmatprep.subr.mxu0 0.0
    %709 = vmatpush1.msra.mxu0 0.0
    %710 = vmatprep.subr.mxu0 0.0
    %711 = vmatpush1.msra.mxu0 0.0
    %712 = vmatprep.subr.mxu0 0.0
    %713 = vmatpush1.msra.mxu0 0.0
    %714 = vmatprep.subr.mxu0 0.0
    %715 = vmatpush1.msra.mxu0 0.0
    %716 = vmatprep.subr.mxu0 0.0
    %717 = vmatpush1.msra.mxu0 0.0
    %718 = vmatprep.subr.mxu0 0.0
    %719 = vmatpush1.msra.mxu0 0.0
    %720 = vmatprep.mubr.f32.mxu0 0.0
    %v721 = vand.u32 %v649, 4294901760
    %v722 = vsub.f32 %v649, %v721
    %v723 = vand.u32 %v722, 4294901760
    %v724 = vsub.f32 %v722, %v723
    %v725 = vand.u32 %v724, 4294901760
    %726 = vmatmul.mubr.f32.gmra.mrb[0].mxu0 %v725
    %v727 = vpop.f32.mrb[0].mxu0
    %v728 = vadd.f32 %v645, %v727
    %v729 = vpop.f32.mrb[0].mxu0
    %730 = vdwg.mxu0
    %731 = vmatprep.subr.mxu0 0.0
    %v732 = vand.u32 %v653, 4294901760
    %v733 = vsub.f32 %v653, %v732
    %v734 = vand.u32 %v733, 4294901760
    %v735 = vsub.f32 %v733, %v734
    %v736 = vand.u32 %v735, 4294901760
    %737 = vmatpush1.msra.mxu0 %v736
    %738 = vmatprep.subr.mxu0 0.0
    %739 = vmatpush1.msra.mxu0 0.0
    %740 = vmatprep.subr.mxu0 0.0
    %741 = vmatpush1.msra.mxu0 0.0
    %742 = vmatprep.subr.mxu0 0.0
    %743 = vmatpush1.msra.mxu0 0.0
    %744 = vmatprep.subr.mxu0 0.0
    %745 = vmatpush1.msra.mxu0 0.0
    %746 = vmatprep.subr.mxu0 0.0
    %747 = vmatpush1.msra.mxu0 0.0
    %748 = vmatprep.subr.mxu0 0.0
    %749 = vmatpush1.msra.mxu0 0.0
    %750 = vmatprep.subr.mxu0 0.0
    %751 = vmatpush1.msra.mxu0 0.0
    %752 = vmatprep.subr.mxu0 0.0
    %753 = vmatpush1.msra.mxu0 0.0
    %754 = vmatprep.subr.mxu0 0.0
    %755 = vmatpush1.msra.mxu0 0.0
    %756 = vmatprep.subr.mxu0 0.0
    %757 = vmatpush1.msra.mxu0 0.0
    %758 = vmatprep.subr.mxu0 0.0
    %759 = vmatpush1.msra.mxu0 0.0
    %760 = vmatprep.subr.mxu0 0.0
    %761 = vmatpush1.msra.mxu0 0.0
    %762 = vmatprep.subr.mxu0 0.0
    %763 = vmatpush1.msra.mxu0 0.0
    %764 = vmatprep.subr.mxu0 0.0
    %765 = vmatpush1.msra.mxu0 0.0
    %766 = vmatprep.subr.mxu0 0.0
    %767 = vmatpush1.msra.mxu0 0.0
    %768 = vmatprep.subr.mxu0 0.0
    %769 = vmatpush1.msra.mxu0 0.0
    %770 = vmatprep.subr.mxu0 0.0
    %771 = vmatpush1.msra.mxu0 0.0
    %772 = vmatprep.subr.mxu0 0.0
    %773 = vmatpush1.msra.mxu0 0.0
    %774 = vmatprep.subr.mxu0 0.0
    %775 = vmatpush1.msra.mxu0 0.0
    %776 = vmatprep.subr.mxu0 0.0
    %777 = vmatpush1.msra.mxu0 0.0
    %778 = vmatprep.subr.mxu0 0.0
    %779 = vmatpush1.msra.mxu0 0.0
    %780 = vmatprep.subr.mxu0 0.0
    %781 = vmatpush1.msra.mxu0 0.0
    %782 = vmatprep.subr.mxu0 0.0
    %783 = vmatpush1.msra.mxu0 0.0
    %784 = vmatprep.subr.mxu0 0.0
    %785 = vmatpush1.msra.mxu0 0.0
    %786 = vmatprep.subr.mxu0 0.0
    %787 = vmatpush1.msra.mxu0 0.0
    %788 = vmatprep.subr.mxu0 0.0
    %789 = vmatpush1.msra.mxu0 0.0
    %790 = vmatprep.subr.mxu0 0.0
    %791 = vmatpush1.msra.mxu0 0.0
    %792 = vmatprep.subr.mxu0 0.0
    %793 = vmatpush1.msra.mxu0 0.0
    %794 = vmatprep.subr.mxu0 0.0
    %795 = vmatpush1.msra.mxu0 0.0
    %796 = vmatprep.subr.mxu0 0.0
    %797 = vmatpush1.msra.mxu0 0.0
    %798 = vmatprep.subr.mxu0 0.0
    %799 = vmatpush1.msra.mxu0 0.0
    %800 = vmatprep.mubr.f32.mxu0 0.0
    %v801 = vand.u32 %v649, 4294901760
    %802 = vmatmul.mubr.f32.gmra.mrb[0].mxu0 %v801
    %v803 = vpop.f32.mrb[0].mxu0
    %v804 = vadd.f32 %v728, %v803
    %v805 = vpop.f32.mrb[0].mxu0
    %806 = vdwg.mxu0
    %807 = vmatprep.subr.mxu0 0.0
    %v808 = vand.u32 %v653, 4294901760
    %v809 = vsub.f32 %v653, %v808
    %810 = vmatpush1.msra.mxu0 %v809
    %811 = vmatprep.subr.mxu0 0.0
    %812 = vmatpush1.msra.mxu0 0.0
    %813 = vmatprep.subr.mxu0 0.0
    %814 = vmatpush1.msra.mxu0 0.0
    %815 = vmatprep.subr.mxu0 0.0
    %816 = vmatpush1.msra.mxu0 0.0
    %817 = vmatprep.subr.mxu0 0.0
    %818 = vmatpush1.msra.mxu0 0.0
    %819 = vmatprep.subr.mxu0 0.0
    %820 = vmatpush1.msra.mxu0 0.0
    %821 = vmatprep.subr.mxu0 0.0
    %822 = vmatpush1.msra.mxu0 0.0
    %823 = vmatprep.subr.mxu0 0.0
    %824 = vmatpush1.msra.mxu0 0.0
    %825 = vmatprep.subr.mxu0 0.0
    %826 = vmatpush1.msra.mxu0 0.0
    %827 = vmatprep.subr.mxu0 0.0
    %828 = vmatpush1.msra.mxu0 0.0
    %829 = vmatprep.subr.mxu0 0.0
    %830 = vmatpush1.msra.mxu0 0.0
    %831 = vmatprep.subr.mxu0 0.0
    %832 = vmatpush1.msra.mxu0 0.0
    %833 = vmatprep.subr.mxu0 0.0
    %834 = vmatpush1.msra.mxu0 0.0
    %835 = vmatprep.subr.mxu0 0.0
    %836 = vmatpush1.msra.mxu0 0.0
    %837 = vmatprep.subr.mxu0 0.0
    %838 = vmatpush1.msra.mxu0 0.0
    %839 = vmatprep.subr.mxu0 0.0
    %840 = vmatpush1.msra.mxu0 0.0
    %841 = vmatprep.subr.mxu0 0.0
    %842 = vmatpush1.msra.mxu0 0.0
    %843 = vmatprep.subr.mxu0 0.0
    %844 = vmatpush1.msra.mxu0 0.0
    %845 = vmatprep.subr.mxu0 0.0
    %846 = vmatpush1.msra.mxu0 0.0
    %847 = vmatprep.subr.mxu0 0.0
    %848 = vmatpush1.msra.mxu0 0.0
    %849 = vmatprep.subr.mxu0 0.0
    %850 = vmatpush1.msra.mxu0 0.0
    %851 = vmatprep.subr.mxu0 0.0
    %852 = vmatpush1.msra.mxu0 0.0
    %853 = vmatprep.subr.mxu0 0.0
    %854 = vmatpush1.msra.mxu0 0.0
    %855 = vmatprep.subr.mxu0 0.0
    %856 = vmatpush1.msra.mxu0 0.0
    %857 = vmatprep.subr.mxu0 0.0
    %858 = vmatpush1.msra.mxu0 0.0
    %859 = vmatprep.subr.mxu0 0.0
    %860 = vmatpush1.msra.mxu0 0.0
    %861 = vmatprep.subr.mxu0 0.0
    %862 = vmatpush1.msra.mxu0 0.0
    %863 = vmatprep.subr.mxu0 0.0
    %864 = vmatpush1.msra.mxu0 0.0
    %865 = vmatprep.subr.mxu0 0.0
    %866 = vmatpush1.msra.mxu0 0.0
    %867 = vmatprep.subr.mxu0 0.0
    %868 = vmatpush1.msra.mxu0 0.0
    %869 = vmatprep.subr.mxu0 0.0
    %870 = vmatpush1.msra.mxu0 0.0
    %871 = vmatprep.subr.mxu0 0.0
    %872 = vmatpush1.msra.mxu0 0.0
    %873 = vmatprep.mubr.f32.mxu0 0.0
    %v874 = vand.u32 %v649, 4294901760
    %v875 = vsub.f32 %v649, %v874
    %876 = vmatmul.mubr.f32.gmra.mrb[0].mxu0 %v875
    %v877 = vpop.f32.mrb[0].mxu0
    %v878 = vadd.f32 %v804, %v877
    %v879 = vpop.f32.mrb[0].mxu0
    %880 = vdwg.mxu0
    %881 = vmatprep.subr.mxu0 0.0
    %v882 = vand.u32 %v653, 4294901760
    %883 = vmatpush1.msra.mxu0 %v882
    %884 = vmatprep.subr.mxu0 0.0
    %885 = vmatpush1.msra.mxu0 0.0
    %886 = vmatprep.subr.mxu0 0.0
    %887 = vmatpush1.msra.mxu0 0.0
    %888 = vmatprep.subr.mxu0 0.0
    %889 = vmatpush1.msra.mxu0 0.0
    %890 = vmatprep.subr.mxu0 0.0
    %891 = vmatpush1.msra.mxu0 0.0
    %892 = vmatprep.subr.mxu0 0.0
    %893 = vmatpush1.msra.mxu0 0.0
    %894 = vmatprep.subr.mxu0 0.0
    %895 = vmatpush1.msra.mxu0 0.0
    %896 = vmatprep.subr.mxu0 0.0
    %897 = vmatpush1.msra.mxu0 0.0
    %898 = vmatprep.subr.mxu0 0.0
    %899 = vmatpush1.msra.mxu0 0.0
    %900 = vmatprep.subr.mxu0 0.0
    %901 = vmatpush1.msra.mxu0 0.0
    %902 = vmatprep.subr.mxu0 0.0
    %903 = vmatpush1.msra.mxu0 0.0
    %904 = vmatprep.subr.mxu0 0.0
    %905 = vmatpush1.msra.mxu0 0.0
    %906 = vmatprep.subr.mxu0 0.0
    %907 = vmatpush1.msra.mxu0 0.0
    %908 = vmatprep.subr.mxu0 0.0
    %909 = vmatpush1.msra.mxu0 0.0
    %910 = vmatprep.subr.mxu0 0.0
    %911 = vmatpush1.msra.mxu0 0.0
    %912 = vmatprep.subr.mxu0 0.0
    %913 = vmatpush1.msra.mxu0 0.0
    %914 = vmatprep.subr.mxu0 0.0
    %915 = vmatpush1.msra.mxu0 0.0
    %916 = vmatprep.subr.mxu0 0.0
    %917 = vmatpush1.msra.mxu0 0.0
    %918 = vmatprep.subr.mxu0 0.0
    %919 = vmatpush1.msra.mxu0 0.0
    %920 = vmatprep.subr.mxu0 0.0
    %921 = vmatpush1.msra.mxu0 0.0
    %922 = vmatprep.subr.mxu0 0.0
    %923 = vmatpush1.msra.mxu0 0.0
    %924 = vmatprep.subr.mxu0 0.0
    %925 = vmatpush1.msra.mxu0 0.0
    %926 = vmatprep.subr.mxu0 0.0
    %927 = vmatpush1.msra.mxu0 0.0
    %928 = vmatprep.subr.mxu0 0.0
    %929 = vmatpush1.msra.mxu0 0.0
    %930 = vmatprep.subr.mxu0 0.0
    %931 = vmatpush1.msra.mxu0 0.0
    %932 = vmatprep.subr.mxu0 0.0
    %933 = vmatpush1.msra.mxu0 0.0
    %934 = vmatprep.subr.mxu0 0.0
    %935 = vmatpush1.msra.mxu0 0.0
    %936 = vmatprep.subr.mxu0 0.0
    %937 = vmatpush1.msra.mxu0 0.0
    %938 = vmatprep.subr.mxu0 0.0
    %939 = vmatpush1.msra.mxu0 0.0
    %940 = vmatprep.subr.mxu0 0.0
    %941 = vmatpush1.msra.mxu0 0.0
    %942 = vmatprep.subr.mxu0 0.0
    %943 = vmatpush1.msra.mxu0 0.0
    %944 = vmatprep.subr.mxu0 0.0
    %945 = vmatpush1.msra.mxu0 0.0
    %946 = vmatprep.mubr.f32.mxu0 0.0
    %v947 = vand.u32 %v649, 4294901760
    %v948 = vsub.f32 %v649, %v947
    %v949 = vand.u32 %v948, 4294901760
    %950 = vmatmul.mubr.f32.gmra.mrb[0].mxu0 %v949
    %v951 = vpop.f32.mrb[0].mxu0
    %v952 = vadd.f32 %v878, %v951
    %v953 = vpop.f32.mrb[0].mxu0
    %954 = vdwg.mxu0
    %955 = vmatprep.subr.mxu0 0.0
    %v956 = vand.u32 %v653, 4294901760
    %v957 = vsub.f32 %v653, %v956
    %v958 = vand.u32 %v957, 4294901760
    %959 = vmatpush1.msra.mxu0 %v958
    %960 = vmatprep.subr.mxu0 0.0
    %961 = vmatpush1.msra.mxu0 0.0
    %962 = vmatprep.subr.mxu0 0.0
    %963 = vmatpush1.msra.mxu0 0.0
    %964 = vmatprep.subr.mxu0 0.0
    %965 = vmatpush1.msra.mxu0 0.0
    %966 = vmatprep.subr.mxu0 0.0
    %967 = vmatpush1.msra.mxu0 0.0
    %968 = vmatprep.subr.mxu0 0.0
    %969 = vmatpush1.msra.mxu0 0.0
    %970 = vmatprep.subr.mxu0 0.0
    %971 = vmatpush1.msra.mxu0 0.0
    %972 = vmatprep.subr.mxu0 0.0
    %973 = vmatpush1.msra.mxu0 0.0
    %974 = vmatprep.subr.mxu0 0.0
    %975 = vmatpush1.msra.mxu0 0.0
    %976 = vmatprep.subr.mxu0 0.0
    %977 = vmatpush1.msra.mxu0 0.0
    %978 = vmatprep.subr.mxu0 0.0
    %979 = vmatpush1.msra.mxu0 0.0
    %980 = vmatprep.subr.mxu0 0.0
    %981 = vmatpush1.msra.mxu0 0.0
    %982 = vmatprep.subr.mxu0 0.0
    %983 = vmatpush1.msra.mxu0 0.0
    %984 = vmatprep.subr.mxu0 0.0
    %985 = vmatpush1.msra.mxu0 0.0
    %986 = vmatprep.subr.mxu0 0.0
    %987 = vmatpush1.msra.mxu0 0.0
    %988 = vmatprep.subr.mxu0 0.0
    %989 = vmatpush1.msra.mxu0 0.0
    %990 = vmatprep.subr.mxu0 0.0
    %991 = vmatpush1.msra.mxu0 0.0
    %992 = vmatprep.subr.mxu0 0.0
    %993 = vmatpush1.msra.mxu0 0.0
    %994 = vmatprep.subr.mxu0 0.0
    %995 = vmatpush1.msra.mxu0 0.0
    %996 = vmatprep.subr.mxu0 0.0
    %997 = vmatpush1.msra.mxu0 0.0
    %998 = vmatprep.subr.mxu0 0.0
    %999 = vmatpush1.msra.mxu0 0.0
    %1000 = vmatprep.subr.mxu0 0.0
    %1001 = vmatpush1.msra.mxu0 0.0
    %1002 = vmatprep.subr.mxu0 0.0
    %1003 = vmatpush1.msra.mxu0 0.0
    %1004 = vmatprep.subr.mxu0 0.0
    %1005 = vmatpush1.msra.mxu0 0.0
    %1006 = vmatprep.subr.mxu0 0.0
    %1007 = vmatpush1.msra.mxu0 0.0
    %1008 = vmatprep.subr.mxu0 0.0
    %1009 = vmatpush1.msra.mxu0 0.0
    %1010 = vmatprep.subr.mxu0 0.0
    %1011 = vmatpush1.msra.mxu0 0.0
    %1012 = vmatprep.subr.mxu0 0.0
    %1013 = vmatpush1.msra.mxu0 0.0
    %1014 = vmatprep.subr.mxu0 0.0
    %1015 = vmatpush1.msra.mxu0 0.0
    %1016 = vmatprep.subr.mxu0 0.0
    %1017 = vmatpush1.msra.mxu0 0.0
    %1018 = vmatprep.subr.mxu0 0.0
    %1019 = vmatpush1.msra.mxu0 0.0
    %1020 = vmatprep.subr.mxu0 0.0
    %1021 = vmatpush1.msra.mxu0 0.0
    %1022 = vmatprep.mubr.f32.mxu0 0.0
    %v1023 = vand.u32 %v649, 4294901760
    %1024 = vmatmul.mubr.f32.gmra.mrb[0].mxu0 %v1023
    %v1025 = vpop.f32.mrb[0].mxu0
    %v1026 = vadd.f32 %v952, %v1025
    %v1027 = vpop.f32.mrb[0].mxu0
    %1028 = vdwg.mxu0
    %1029 = vmatprep.subr.mxu0 0.0
    %v1030 = vand.u32 %v653, 4294901760
    %1031 = vmatpush1.msra.mxu0 %v1030
    %1032 = vmatprep.subr.mxu0 0.0
    %1033 = vmatpush1.msra.mxu0 0.0
    %1034 = vmatprep.subr.mxu0 0.0
    %1035 = vmatpush1.msra.mxu0 0.0
    %1036 = vmatprep.subr.mxu0 0.0
    %1037 = vmatpush1.msra.mxu0 0.0
    %1038 = vmatprep.subr.mxu0 0.0
    %1039 = vmatpush1.msra.mxu0 0.0
    %1040 = vmatprep.subr.mxu0 0.0
    %1041 = vmatpush1.msra.mxu0 0.0
    %1042 = vmatprep.subr.mxu0 0.0
    %1043 = vmatpush1.msra.mxu0 0.0
    %1044 = vmatprep.subr.mxu0 0.0
    %1045 = vmatpush1.msra.mxu0 0.0
    %1046 = vmatprep.subr.mxu0 0.0
    %1047 = vmatpush1.msra.mxu0 0.0
    %1048 = vmatprep.subr.mxu0 0.0
    %1049 = vmatpush1.msra.mxu0 0.0
    %1050 = vmatprep.subr.mxu0 0.0
    %1051 = vmatpush1.msra.mxu0 0.0
    %1052 = vmatprep.subr.mxu0 0.0
    %1053 = vmatpush1.msra.mxu0 0.0
    %1054 = vmatprep.subr.mxu0 0.0
    %1055 = vmatpush1.msra.mxu0 0.0
    %1056 = vmatprep.subr.mxu0 0.0
    %1057 = vmatpush1.msra.mxu0 0.0
    %1058 = vmatprep.subr.mxu0 0.0
    %1059 = vmatpush1.msra.mxu0 0.0
    %1060 = vmatprep.subr.mxu0 0.0
    %1061 = vmatpush1.msra.mxu0 0.0
    %1062 = vmatprep.subr.mxu0 0.0
    %1063 = vmatpush1.msra.mxu0 0.0
    %1064 = vmatprep.subr.mxu0 0.0
    %1065 = vmatpush1.msra.mxu0 0.0
    %1066 = vmatprep.subr.mxu0 0.0
    %1067 = vmatpush1.msra.mxu0 0.0
    %1068 = vmatprep.subr.mxu0 0.0
    %1069 = vmatpush1.msra.mxu0 0.0
    %1070 = vmatprep.subr.mxu0 0.0
    %1071 = vmatpush1.msra.mxu0 0.0
    %1072 = vmatprep.subr.mxu0 0.0
    %1073 = vmatpush1.msra.mxu0 0.0
    %1074 = vmatprep.subr.mxu0 0.0
    %1075 = vmatpush1.msra.mxu0 0.0
    %1076 = vmatprep.subr.mxu0 0.0
    %1077 = vmatpush1.msra.mxu0 0.0
    %1078 = vmatprep.subr.mxu0 0.0
    %1079 = vmatpush1.msra.mxu0 0.0
    %1080 = vmatprep.subr.mxu0 0.0
    %1081 = vmatpush1.msra.mxu0 0.0
    %1082 = vmatprep.subr.mxu0 0.0
    %1083 = vmatpush1.msra.mxu0 0.0
    %1084 = vmatprep.subr.mxu0 0.0
    %1085 = vmatpush1.msra.mxu0 0.0
    %1086 = vmatprep.subr.mxu0 0.0
    %1087 = vmatpush1.msra.mxu0 0.0
    %1088 = vmatprep.subr.mxu0 0.0
    %1089 = vmatpush1.msra.mxu0 0.0
    %1090 = vmatprep.subr.mxu0 0.0
    %1091 = vmatpush1.msra.mxu0 0.0
    %1092 = vmatprep.subr.mxu0 0.0
    %1093 = vmatpush1.msra.mxu0 0.0
    %1094 = vmatprep.mubr.f32.mxu0 0.0
    %v1095 = vand.u32 %v649, 4294901760
    %1096 = vmatmul.mubr.f32.gmra.mrb[0].mxu0 %v1095
    %v1097 = vpop.f32.mrb[0].mxu0
    %v1098 = vadd.f32 %v1026, %v1097
    %v1099 = vpop.f32.mrb[0].mxu0
    %1100 = vdwg.mxu0
    %v1101 = vxor.u32 %v1098, 2147483648
    %v1102 = vmul.f32 %v1101, 1.442695
    %v1103 = vpow.pop %v1102
    %v1104 = vadd.f32 %v1103, 1.0
    %v1105 = vrcp.pop %v1104
    %v1106 = vmul.f32 1.0, %v1105
    %v1107 = vlaneseq
    %v1108 = vshrl.u32 %v1107, 7
    %v1109 = vsub.s32 0, %v1108
    %v1110 = vrot.slane %v1106, %v1109
    %1112 = vbcast.lane.b32.xlu0 %v1110, 256
    %v1113 = vpop.permute.xlu0 %1112
    %s1115 = sor.u32 256, 8
    %1116 = vbcast.lane.b32.xlu0 %v1110, %s1115
    %v1117 = vpop.permute.xlu0 %1116
    %s1119 = sor.u32 256, 16
    %1120 = vbcast.lane.b32.xlu0 %v1110, %s1119
    %v1121 = vpop.permute.xlu0 %1120
    %s1123 = sor.u32 256, 24
    %1124 = vbcast.lane.b32.xlu0 %v1110, %s1123
    %v1125 = vpop.permute.xlu0 %1124
    %v1126 = vlaneseq
    %v1127 = vshrl.u32 %v1126, 7
    %v1128 = vsub.s32 1, %v1127
    %v1129 = vrot.slane %v1106, %v1128
    %1131 = vbcast.lane.b32.xlu0 %v1129, 256
    %v1132 = vpop.permute.xlu0 %1131
    %s1134 = sor.u32 256, 8
    %1135 = vbcast.lane.b32.xlu0 %v1129, %s1134
    %v1136 = vpop.permute.xlu0 %1135
    %s1138 = sor.u32 256, 16
    %1139 = vbcast.lane.b32.xlu0 %v1129, %s1138
    %v1140 = vpop.permute.xlu0 %1139
    %s1142 = sor.u32 256, 24
    %1143 = vbcast.lane.b32.xlu0 %v1129, %s1142
    %v1144 = vpop.permute.xlu0 %1143
    %v1145 = vmul.f32 %v35, %v1113
    %v1146 = vmul.f32 %v36, %v1113
    %v1147 = vmul.f32 %v37, %v1117
    %v1148 = vmul.f32 %v38, %v1117
    %v1149 = vmul.f32 %v39, %v1121
    %v1150 = vmul.f32 %v40, %v1121
    %v1151 = vmul.f32 %v41, %v1125
    %v1152 = vmul.f32 %v42, %v1125
    %v1153 = vmul.f32 %v43, %v1132
    %v1154 = vmul.f32 %v44, %v1132
    %v1155 = vmul.f32 %v45, %v1136
    %v1156 = vmul.f32 %v46, %v1136
    %v1157 = vmul.f32 %v47, %v1140
    %v1158 = vmul.f32 %v48, %v1140
    %v1159 = vmul.f32 %v49, %v1144
    %v1160 = vmul.f32 %v50, %v1144
    %1161 = vst [vmem:[#allocation5] sm:$0xff] %v1145
    %1162 = vst [vmem:[#allocation5 + $0x8] sm:$0xff] %v1146
    %1163 = vst [vmem:[#allocation5 + $0x10] sm:$0xff] %v1147
    %1164 = vst [vmem:[#allocation5 + $0x18] sm:$0xff] %v1148
    %1165 = vst [vmem:[#allocation5 + $0x20] sm:$0xff] %v1149
    %1166 = vst [vmem:[#allocation5 + $0x28] sm:$0xff] %v1150
    %1167 = vst [vmem:[#allocation5 + $0x30] sm:$0xff] %v1151
    %1168 = vst [vmem:[#allocation5 + $0x38] sm:$0xff] %v1152
    %1169 = vst [vmem:[#allocation5 + $0x40] sm:$0xff] %v1153
    %1170 = vst [vmem:[#allocation5 + $0x48] sm:$0xff] %v1154
    %1171 = vst [vmem:[#allocation5 + $0x50] sm:$0xff] %v1155
    %1172 = vst [vmem:[#allocation5 + $0x58] sm:$0xff] %v1156
    %1173 = vst [vmem:[#allocation5 + $0x60] sm:$0xff] %v1157
    %1174 = vst [vmem:[#allocation5 + $0x68] sm:$0xff] %v1158
    %1175 = vst [vmem:[#allocation5 + $0x70] sm:$0xff] %v1159
    %1176 = vst [vmem:[#allocation5 + $0x78] sm:$0xff] %v1160
    // Predicated region
    $region26: #{tpu_custom_call.1} parent=1 // pred_check
      _
    $region27: #{tpu_custom_call.1} parent=1 // pred_check_branch
      %1178 = sbr.rel (0) target = $region29
    $region28: #{tpu_custom_call.1} parent=1 // pred_region
      %s1180 = ssub.s32 2048, 2048
      %1181 = vsyncadd [#allocation4], %s1180
      %s1182 = sshll.u32 [#allocation5], 4
      %s1183 = int_to_ptr.vmem [resolvable:$true] %s1182
      %1188 = dma.vmem_to_hbm [thread:$0]  %s1183, 2048, %s5, [#allocation4], 256, 256, 16
    $region29: #{tpu_custom_call.1} parent=1 // pred_fallthru
      _
    // Predicated region
    $region30: #{tpu_custom_call.1} parent=1 // pred_check
      _
    $region31: #{tpu_custom_call.1} parent=1 // pred_check_branch
      %1190 = sbr.rel (0) target = $region33
    $region32: #{tpu_custom_call.1} parent=1 // pred_region
      %1191 = dma.done [#allocation4], 2048
    $region33: #{tpu_custom_call.1} parent=1 // pred_fallthru
      _
    %1192 = vsyncpa [#allocation3], 1
    %1193 = vsyncpa [#allocation4], 1

</llo_original>
